<compile_context>
chip_gen: v7x
topology: tpu7x:2x2x1
jax: 0.10.0
libtpu: 0.0.40
codegen_flags: <defaults>
</compile_context>

<pallas_src>
from collections import OrderedDict

import jax
import jax.numpy as jnp
from jax import lax
from jax.experimental import pallas as pl
from jax.experimental.pallas import tpu as pltpu

EMB_DIM = 32
_LANES = 128
_SUBLANES = 8


def _round_up(x, m):
    return ((x + m - 1) // m) * m


def _choose_batch_tile(B, target=256):
    """Batch tile (multiple of 8) + padded batch; keep grid >= 2 when possible."""
    Bp = _round_up(max(int(B), 1), _SUBLANES)
    bt = max(_SUBLANES, (min(target, Bp) // _SUBLANES) * _SUBLANES)
    if Bp > _SUBLANES and Bp // bt < 2:
        # keep >= 2 grid steps so v7x's two TensorCores both get work
        bt = _round_up((Bp + 1) // 2, _SUBLANES)
    Bp = _round_up(Bp, bt)
    return bt, Bp


def _default_resident_budget():
    """VMEM budget for resident embedding tables, re-derived per chip gen."""
    try:
        phys = int(pltpu.get_tpu_info().vmem_capacity_bytes)
    except Exception:
        phys = 64 * 1024 * 1024          # v7x floor: 64 MiB per TensorCore
    return min(phys // 4, 24 * 1024 * 1024)


# ---------------------------------------------------------------------------
# fused kernel: VMEM-resident dynamic-row gathers + HBM DMA gather fallback +
# numeric Linear + masked sum pooling, writing straight into one lane-dense
# (BT, F*D) output block
# ---------------------------------------------------------------------------
def _make_kernel(meta, BT, D, FD_pad):
    n_gather = sum(1 for m in meta if m["kind"] in ("categorical", "sequence"))
    n_num = sum(1 for m in meta if m["kind"] == "numeric")
    n_res = sum(1 for m in meta if m.get("resident", False))
    n_dma = n_gather - n_res
    FD = len(meta) * D

    def kernel(*refs):
        pos = 0
        idx_refs = refs[pos:pos + n_gather]; pos += n_gather        # SMEM int32
        num_refs = refs[pos:pos + 2 * n_num]; pos += 2 * n_num      # (value, weight)
        res_tbls = refs[pos:pos + n_res]; pos += n_res              # VMEM tables
        dma_tbls = refs[pos:pos + n_dma]; pos += n_dma              # HBM tables
        out_ref = refs[pos]; pos += 1                               # (BT, FD_pad)
        dma_stage = refs[pos:pos + n_dma]; pos += n_dma             # VMEM staging
        sems = refs[pos] if n_dma else None                         # DMA semaphores

        base = pl.program_id(0) * BT

        # keep the lane-padded tail deterministic (only if FD was padded)
        if FD_pad > FD:
            out_ref[:, FD:FD_pad] = jnp.zeros((BT, FD_pad - FD), jnp.float32)

        # -- 1) kick off the HBM row-gather DMAs for over-budget tables ------
        gi = di = 0
        for m in meta:
            if m["kind"] not in ("categorical", "sequence"):
                continue
            if not m["resident"]:
                idx_ref, tbl, stage = idx_refs[gi], dma_tbls[di], dma_stage[di]
                sem = sems.at[di]
                L = m.get("L", 1)
                n_rows = BT * L
                row_base = base * L

                def _issue(t, c, idx_ref=idx_ref, tbl=tbl, stage=stage,
                           sem=sem, row_base=row_base):
                    pltpu.make_async_copy(
                        tbl.at[pl.ds(idx_ref[row_base + t], 1), :],
                        stage.at[pl.ds(t, 1), :],
                        sem).start()
                    return c

                lax.fori_loop(0, n_rows, _issue, 0)
                di += 1
            gi += 1

        # -- 2) numeric features + resident-table gathers while DMAs fly -----
        gi = ri = ni = 0
        for fi, m in enumerate(meta):
            col = fi * D
            if m["kind"] == "numeric":
                x_ref, w_ref = num_refs[2 * ni], num_refs[2 * ni + 1]
                out_ref[:, col:col + D] = x_ref[...] * w_ref[...]   # (BT,1)*(1,D)
                ni += 1
                continue
            idx_ref = idx_refs[gi]; gi += 1
            if not m["resident"]:
                continue
            tbl = res_tbls[ri]; ri += 1
            if m["kind"] == "categorical":
                def _cat(b, c, idx_ref=idx_ref, tbl=tbl, col=col):
                    row = tbl[pl.ds(idx_ref[base + b], 1), :]
                    out_ref[pl.ds(b, 1), col:col + D] = row
                    return c
                lax.fori_loop(0, BT, _cat, 0)
            else:                                   # sequence: masked sum pool
                L, pad = m["L"], m["pad"]

                def _seq(b, c, idx_ref=idx_ref, tbl=tbl, col=col, L=L, pad=pad):
                    acc = jnp.zeros((1, D), jnp.float32)
                    for l in range(L):              # short, static -> unrolled
                        idx = idx_ref[(base + b) * L + l]
                        valid = (idx != pad).astype(jnp.float32)
                        acc = acc + tbl[pl.ds(idx, 1), :] * valid
                    out_ref[pl.ds(b, 1), col:col + D] = acc
                    return c
                lax.fori_loop(0, BT, _seq, 0)

        # -- 3) drain the DMA gathers and finish those features --------------
        gi = di = 0
        for fi, m in enumerate(meta):
            col = fi * D
            if m["kind"] == "numeric":
                continue
            idx_ref = idx_refs[gi]; gi += 1
            if m["resident"]:
                continue
            tbl, stage, sem = dma_tbls[di], dma_stage[di], sems.at[di]
            di += 1
            L = m.get("L", 1)
            n_rows = BT * L

            def _drain(t, c, tbl=tbl, stage=stage, sem=sem):
                # wait byte count matches the issued (1, D) row copies
                pltpu.make_async_copy(tbl.at[pl.ds(0, 1), :],
                                      stage.at[pl.ds(0, 1), :], sem).wait()
                return c
            lax.fori_loop(0, n_rows, _drain, 0)

            if m["kind"] == "categorical":
                out_ref[:, col:col + D] = stage[...]
            else:
                pad = m["pad"]

                def _seqd(b, c, idx_ref=idx_ref, stage=stage, col=col,
                          L=L, pad=pad):
                    acc = jnp.zeros((1, D), jnp.float32)
                    for l in range(L):
                        idx = idx_ref[(base + b) * L + l]
                        valid = (idx != pad).astype(jnp.float32)
                        acc = acc + stage[pl.ds(b * L + l, 1), :] * valid
                    out_ref[pl.ds(b, 1), col:col + D] = acc
                    return c
                lax.fori_loop(0, BT, _seqd, 0)

    return kernel


def fused_embedding_forward(plan, B, D, *, batch_tile=256,
                            resident_budget_bytes=None):
    """plan: list of per-feature dicts (kind + operands), in output order."""
    BT, Bp = _choose_batch_tile(B, batch_tile)
    grid = (Bp // BT,)
    FD = len(plan) * D
    FD_pad = _round_up(FD, _LANES)            # lane-dense output width

    if resident_budget_bytes is None:
        resident_budget_bytes = _default_resident_budget()

    # Smallest tables become VMEM resident first; the largest vocabularies
    # spill to the HBM DMA-gather path first.
    gathers = [p for p in plan if p["kind"] in ("categorical", "sequence")]
    budget = int(resident_budget_bytes)
    for p in sorted(gathers, key=lambda q: int(q["table"].size)):
        tbytes = int(p["table"].size) * p["table"].dtype.itemsize
        p["resident"] = tbytes <= budget
        if p["resident"]:
            budget -= tbytes

    def _pad_rows(a, rows, fill):
        if a.shape[0] == rows:
            return a
        tail = jnp.full((rows - a.shape[0],) + a.shape[1:], fill, a.dtype)
        return jnp.concatenate([a, tail], axis=0)

    in_specs, args = [], []
    # 1) gather indices -> SMEM, flattened to 1D (2D s32 pads lanes to 128)
    #    TODO(synk): batch-tile these SMEM blocks for very large batches.
    for p in plan:
        if p["kind"] == "categorical":
            in_specs.append(pl.BlockSpec(memory_space=pltpu.MemorySpace.SMEM))
            args.append(_pad_rows(p["idx"].astype(jnp.int32), Bp, 0))
        elif p["kind"] == "sequence":
            in_specs.append(pl.BlockSpec(memory_space=pltpu.MemorySpace.SMEM))
            idx = _pad_rows(p["idx"].astype(jnp.int32), Bp, p["pad"])
            args.append(idx.reshape(-1))
    # 2) numeric: batch-tiled value column + resident Linear(1, D) weight
    for p in plan:
        if p["kind"] == "numeric":
            in_specs.append(pl.BlockSpec((BT, 1), lambda i: (i, 0)))
            args.append(_pad_rows(p["value"].astype(jnp.float32), Bp, 0.0))
            in_specs.append(pl.BlockSpec(memory_space=pltpu.MemorySpace.VMEM))
            args.append(p["weight"])
    # 3) VMEM-resident tables (gathered with in-kernel dynamic sublane loads)
    for p in plan:
        if p["kind"] in ("categorical", "sequence") and p["resident"]:
            in_specs.append(pl.BlockSpec(memory_space=pltpu.MemorySpace.VMEM))
            args.append(p["table"])
    # 4) over-budget tables stay in HBM; rows are DMA-gathered in the kernel
    for p in plan:
        if p["kind"] in ("categorical", "sequence") and not p["resident"]:
            in_specs.append(pl.BlockSpec(memory_space=pl.ANY))
            args.append(p["table"])

    scratch, n_dma = [], 0
    for p in plan:
        if p["kind"] in ("categorical", "sequence") and not p["resident"]:
            rows = BT * (p["L"] if p["kind"] == "sequence" else 1)
            scratch.append(pltpu.VMEM((rows, D), jnp.float32))
            n_dma += 1
    if n_dma:
        scratch.append(pltpu.SemaphoreType.DMA((n_dma,)))

    meta = []
    for p in plan:
        m = {"kind": p["kind"]}
        if p["kind"] in ("categorical", "sequence"):
            m["resident"] = p["resident"]
        if p["kind"] == "sequence":
            m["L"] = p["L"]
            m["pad"] = p["pad"]
        meta.append(m)

    # explicit scoped-VMEM budget: resident tables + blocks + gather staging,
    # capped well below v7x's 64 MiB physical VMEM
    res_bytes = sum(int(p["table"].size) * p["table"].dtype.itemsize
                    for p in gathers if p["resident"])
    stage_bytes = sum(BT * (p["L"] if p["kind"] == "sequence" else 1) * D * 4
                      for p in gathers if not p["resident"])
    block_bytes = (2 * BT * FD_pad * 4
                   + 2 * BT * 4 * sum(1 for p in plan if p["kind"] == "numeric"))
    est = res_bytes + stage_bytes + block_bytes + (1 << 20)
    vmem_limit = int(min(40 * 1024 * 1024, max(16 * 1024 * 1024, 2 * est)))

    out = pl.pallas_call(
        _make_kernel(meta, BT, D, FD_pad),
        out_shape=jax.ShapeDtypeStruct((Bp, FD_pad), jnp.float32),
        grid=grid,
        in_specs=in_specs,
        out_specs=pl.BlockSpec((BT, FD_pad), lambda i: (i, 0)),
        scratch_shapes=scratch,
        compiler_params=pltpu.CompilerParams(
            dimension_semantics=("parallel",),
            vmem_limit_bytes=vmem_limit),
    )(*args)
    return out[:B, :FD]


# ---------------------------------------------------------------------------
# FeatureEmbeddingDict equivalent
# ---------------------------------------------------------------------------
class FeatureEmbeddingDictPallas:
    def __init__(self, feature_map, embedding_dim, key, init_std=1e-4):
        self.feature_map = dict(feature_map)
        self.embedding_dim = embedding_dim
        self.params = {}
        for feature, spec in feature_map.items():
            key, sub = jax.random.split(key)
            if spec["type"] == "numeric":
                # nn.Linear(1, D, bias=False); stored as W^T with shape (1, D)
                self.params[feature] = (
                    jax.random.normal(sub, (1, embedding_dim), jnp.float32) * init_std)
            elif spec["type"] in ("categorical", "sequence"):
                V = spec["vocab_size"]
                w = jax.random.normal(sub, (V, embedding_dim), jnp.float32) * init_std
                pad = spec.get("padding_idx", None)
                if pad is not None:
                    w = w.at[pad, :].set(0.0)
                self.params[feature] = w
            else:
                raise NotImplementedError(spec["type"])
        key, sub = jax.random.split(key)
        # self.embedding_layers['label'] = nn.Embedding(2, feat_dim)
        self.params["label"] = (
            jax.random.normal(sub, (2, embedding_dim), jnp.float32) * init_std)

    def forward(self, inputs, *, batch_tile=256, resident_budget_bytes=None):
        B = next(iter(inputs.values())).shape[0]
        D = self.embedding_dim
        plan = []
        for feature, value in inputs.items():
            if feature == "label":
                plan.append(dict(name=feature, kind="categorical",
                                 idx=value.astype(jnp.int32),
                                 table=self.params["label"]))
                continue
            spec = self.feature_map[feature]
            if spec["type"] == "numeric":
                plan.append(dict(name=feature, kind="numeric",
                                 value=value.astype(jnp.float32).reshape(B, 1),
                                 weight=self.params[feature]))
            elif spec["type"] == "categorical":
                plan.append(dict(name=feature, kind="categorical",
                                 idx=value.astype(jnp.int32),
                                 table=self.params[feature]))
            elif spec["type"] == "sequence":
                pad = spec.get("padding_idx", 0)
                idx = value.astype(jnp.int32)
                plan.append(dict(name=feature, kind="sequence", idx=idx,
                                 L=idx.shape[1], pad=pad,
                                 table=self.params[feature]))
            else:
                raise NotImplementedError(spec["type"])

        fused = fused_embedding_forward(
            plan, B, D, batch_tile=batch_tile,
            resident_budget_bytes=resident_budget_bytes)   # (B, F*D), lane dense

        out = OrderedDict()
        for k, p in enumerate(plan):
            out[p["name"]] = fused[:, k * D:(k + 1) * D]
        return out


if __name__ == "__main__":
    B, L = 16, 8
    feature_map = {
        "user_id": {"type": "categorical", "vocab_size": 100},
        "price": {"type": "numeric"},
        "hist_items": {"type": "sequence", "vocab_size": 50, "padding_idx": 0,
                       "feature_encoder": "masked_sum_pooling"},
    }

    model = FeatureEmbeddingDictPallas(feature_map, EMB_DIM, jax.random.PRNGKey(0))

    k1, k2, k3, k4 = jax.random.split(jax.random.PRNGKey(0), 4)
    inputs = OrderedDict(
        user_id=jax.random.randint(k1, (B,), 0, 100, dtype=jnp.int32),
        price=jax.random.uniform(k2, (B,), dtype=jnp.float32),
        hist_items=jax.random.randint(k3, (B, L), 0, 50, dtype=jnp.int32),
        label=jax.random.randint(k4, (B,), 0, 2, dtype=jnp.int32),
    )

    # Plain-JAX reference of the forward semantics.
    ref = OrderedDict()
    ref["user_id"] = model.params["user_id"][inputs["user_id"]]
    ref["price"] = inputs["price"].reshape(B, 1) * model.params["price"]
    seq_emb = model.params["hist_items"][inputs["hist_items"]]          # (B, L, D)
    mask = (inputs["hist_items"] != 0)[..., None].astype(jnp.float32)
    ref["hist_items"] = jnp.sum(seq_emb * mask, axis=1)                 # masked sum pool
    ref["label"] = model.params["label"][inputs["label"]]

    # 1) default path: all tables fit the resident-VMEM budget (no DMAs)
    out = model.forward(inputs)
    for v in out.values():
        jax.block_until_ready(v)
    for name in ref:
        assert out[name].shape == (B, EMB_DIM)
        assert jnp.allclose(out[name], ref[name], atol=1e-6), name

    # 2) forced HBM DMA-gather fallback (tiny resident budget): exercises the
    #    large-vocab path used when tables do not fit the per-gen VMEM budget
    out2 = model.forward(inputs, resident_budget_bytes=1024)
    for v in out2.values():
        jax.block_until_ready(v)
    for name in ref:
        assert jnp.allclose(out2[name], ref[name], atol=1e-6), name

    print("KERNEL_OK")
</pallas_src>

<mosaic_0001>
module attributes {stable_mosaic.version = 11 : i64} {
  func.func @kernel(%arg0: i32, %arg1: memref<16xi32, #tpu.memory_space<smem>>, %arg2: memref<128xi32, #tpu.memory_space<smem>>, %arg3: memref<16xi32, #tpu.memory_space<smem>>, %arg4: memref<8x1xf32, #tpu.memory_space<vmem>>, %arg5: memref<1x32xf32, #tpu.memory_space<vmem>>, %arg6: memref<100x32xf32, #tpu.memory_space<vmem>>, %arg7: memref<50x32xf32, #tpu.memory_space<vmem>>, %arg8: memref<2x32xf32, #tpu.memory_space<vmem>>, %arg9: memref<8x128xf32, #tpu.memory_space<vmem>>) attributes {dimension_semantics = [#tpu.dimension_semantics<parallel>], iteration_bounds = array<i64: 2>, scalar_prefetch = 0 : i64, scratch_operands = 0 : i64, tpu.core_type = #tpu.core_type<tc>, window_params = [{transform_indices = @transform_0, window_bounds = array<i64: 16>}, {transform_indices = @transform_1, window_bounds = array<i64: 128>}, {transform_indices = @transform_2, window_bounds = array<i64: 16>}, {transform_indices = @transform_3, window_bounds = array<i64: 8, 1>}, {pipeline_mode = #tpu.pipeline_mode<synchronous>, transform_indices = @transform_4, window_bounds = array<i64: 1, 32>}, {pipeline_mode = #tpu.pipeline_mode<synchronous>, transform_indices = @transform_5, window_bounds = array<i64: 100, 32>}, {pipeline_mode = #tpu.pipeline_mode<synchronous>, transform_indices = @transform_6, window_bounds = array<i64: 50, 32>}, {pipeline_mode = #tpu.pipeline_mode<synchronous>, transform_indices = @transform_7, window_bounds = array<i64: 2, 32>}, {transform_indices = @transform_8, window_bounds = array<i64: 8, 128>}]} {
    %c8_i32 = arith.constant 8 : i32
    %0 = arith.muli %arg0, %c8_i32 : i32
    %c0_i32 = arith.constant 0 : i32
    %c8_i32_0 = arith.constant 8 : i32
    %1 = arith.addi %c0_i32, %c8_i32_0 : i32
    %c1_i32 = arith.constant 1 : i32
    scf.for %arg10 = %c0_i32 to %1 step %c1_i32  : i32 {
      %10 = arith.addi %0, %arg10 : i32
      %11 = arith.index_cast %10 : i32 to index
      %12 = memref.load %arg1[%11] : memref<16xi32, #tpu.memory_space<smem>>
      %13 = arith.index_cast %12 : i32 to index
      %c0_14 = arith.constant 0 : index
      %14 = vector.load %arg6[%13, %c0_14] : memref<100x32xf32, #tpu.memory_space<vmem>>, vector<1x32xf32>
      %15 = arith.index_cast %arg10 : i32 to index
      %c0_15 = arith.constant 0 : index
      %16 = vector.load %arg9[%15, %c0_15] : memref<8x128xf32, #tpu.memory_space<vmem>>, vector<1x32xf32>
      tpu.vector_store %arg9[%15, %c0_15], %14 {strides = array<i32>} : memref<8x128xf32, #tpu.memory_space<vmem>>, vector<1x32xf32>,
    }
    %c8_i32_1 = arith.constant 8 : i32
    %c0 = arith.constant 0 : index
    %c0_2 = arith.constant 0 : index
    %2 = vector.load %arg4[%c0, %c0_2] : memref<8x1xf32, #tpu.memory_space<vmem>>, vector<8x1xf32>
    %c0_3 = arith.constant 0 : index
    %c0_4 = arith.constant 0 : index
    %3 = vector.load %arg5[%c0_3, %c0_4] : memref<1x32xf32, #tpu.memory_space<vmem>>, vector<1x32xf32>
    %4 = vector.broadcast %2 : vector<8x1xf32> to vector<8x32xf32>
    %5 = vector.broadcast %3 : vector<1x32xf32> to vector<8x32xf32>
    %6 = arith.mulf %4, %5 : vector<8x32xf32>
    %c0_5 = arith.constant 0 : index
    %c32 = arith.constant 32 : index
    %7 = vector.load %arg9[%c0_5, %c32] : memref<8x128xf32, #tpu.memory_space<vmem>>, vector<8x32xf32>
    tpu.vector_store %arg9[%c0_5, %c32], %6 {strides = array<i32>} : memref<8x128xf32, #tpu.memory_space<vmem>>, vector<8x32xf32>,
    %c0_i32_6 = arith.constant 0 : i32
    %c8_i32_7 = arith.constant 8 : i32
    %8 = arith.addi %c0_i32_6, %c8_i32_7 : i32
    %c1_i32_8 = arith.constant 1 : i32
    scf.for %arg10 = %c0_i32_6 to %8 step %c1_i32_8  : i32 {
      %cst = arith.constant 0.000000e+00 : f32
      %10 = vector.broadcast %cst : f32 to vector<1x32xf32>
      %11 = arith.addi %0, %arg10 : i32
      %c8_i32_14 = arith.constant 8 : i32
      %12 = arith.muli %11, %c8_i32_14 : i32
      %c0_i32_15 = arith.constant 0 : i32
      %13 = arith.addi %12, %c0_i32_15 : i32
      %14 = arith.index_cast %13 : i32 to index
      %15 = memref.load %arg2[%14] : memref<128xi32, #tpu.memory_space<smem>>
      %c0_i32_16 = arith.constant 0 : i32
      %16 = arith.cmpi ne, %15, %c0_i32_16 : i32
      %17 = arith.extui %16 : i1 to i32
      %18 = arith.sitofp %17 : i32 to f32
      %19 = arith.index_cast %15 : i32 to index
      %c0_17 = arith.constant 0 : index
      %20 = vector.load %arg7[%19, %c0_17] : memref<50x32xf32, #tpu.memory_space<vmem>>, vector<1x32xf32>
      %21 = vector.broadcast %18 : f32 to vector<1x32xf32>
      %22 = arith.mulf %20, %21 : vector<1x32xf32>
      %23 = arith.addf %10, %22 : vector<1x32xf32>
      %24 = arith.addi %0, %arg10 : i32
      %c8_i32_18 = arith.constant 8 : i32
      %25 = arith.muli %24, %c8_i32_18 : i32
      %c1_i32_19 = arith.constant 1 : i32
      %26 = arith.addi %25, %c1_i32_19 : i32
      %27 = arith.index_cast %26 : i32 to index
      %28 = memref.load %arg2[%27] : memref<128xi32, #tpu.memory_space<smem>>
      %c0_i32_20 = arith.constant 0 : i32
      %29 = arith.cmpi ne, %28, %c0_i32_20 : i32
      %30 = arith.extui %29 : i1 to i32
      %31 = arith.sitofp %30 : i32 to f32
      %32 = arith.index_cast %28 : i32 to index
      %c0_21 = arith.constant 0 : index
      %33 = vector.load %arg7[%32, %c0_21] : memref<50x32xf32, #tpu.memory_space<vmem>>, vector<1x32xf32>
      %34 = vector.broadcast %31 : f32 to vector<1x32xf32>
      %35 = arith.mulf %33, %34 : vector<1x32xf32>
      %36 = arith.addf %23, %35 : vector<1x32xf32>
      %37 = arith.addi %0, %arg10 : i32
      %c8_i32_22 = arith.constant 8 : i32
      %38 = arith.muli %37, %c8_i32_22 : i32
      %c2_i32 = arith.constant 2 : i32
      %39 = arith.addi %38, %c2_i32 : i32
      %40 = arith.index_cast %39 : i32 to index
      %41 = memref.load %arg2[%40] : memref<128xi32, #tpu.memory_space<smem>>
      %c0_i32_23 = arith.constant 0 : i32
      %42 = arith.cmpi ne, %41, %c0_i32_23 : i32
      %43 = arith.extui %42 : i1 to i32
      %44 = arith.sitofp %43 : i32 to f32
      %45 = arith.index_cast %41 : i32 to index
      %c0_24 = arith.constant 0 : index
      %46 = vector.load %arg7[%45, %c0_24] : memref<50x32xf32, #tpu.memory_space<vmem>>, vector<1x32xf32>
      %47 = vector.broadcast %44 : f32 to vector<1x32xf32>
      %48 = arith.mulf %46, %47 : vector<1x32xf32>
      %49 = arith.addf %36, %48 : vector<1x32xf32>
      %50 = arith.addi %0, %arg10 : i32
      %c8_i32_25 = arith.constant 8 : i32
      %51 = arith.muli %50, %c8_i32_25 : i32
      %c3_i32 = arith.constant 3 : i32
      %52 = arith.addi %51, %c3_i32 : i32
      %53 = arith.index_cast %52 : i32 to index
      %54 = memref.load %arg2[%53] : memref<128xi32, #tpu.memory_space<smem>>
      %c0_i32_26 = arith.constant 0 : i32
      %55 = arith.cmpi ne, %54, %c0_i32_26 : i32
      %56 = arith.extui %55 : i1 to i32
      %57 = arith.sitofp %56 : i32 to f32
      %58 = arith.index_cast %54 : i32 to index
      %c0_27 = arith.constant 0 : index
      %59 = vector.load %arg7[%58, %c0_27] : memref<50x32xf32, #tpu.memory_space<vmem>>, vector<1x32xf32>
      %60 = vector.broadcast %57 : f32 to vector<1x32xf32>
      %61 = arith.mulf %59, %60 : vector<1x32xf32>
      %62 = arith.addf %49, %61 : vector<1x32xf32>
      %63 = arith.addi %0, %arg10 : i32
      %c8_i32_28 = arith.constant 8 : i32
      %64 = arith.muli %63, %c8_i32_28 : i32
      %c4_i32 = arith.constant 4 : i32
      %65 = arith.addi %64, %c4_i32 : i32
      %66 = arith.index_cast %65 : i32 to index
      %67 = memref.load %arg2[%66] : memref<128xi32, #tpu.memory_space<smem>>
      %c0_i32_29 = arith.constant 0 : i32
      %68 = arith.cmpi ne, %67, %c0_i32_29 : i32
      %69 = arith.extui %68 : i1 to i32
      %70 = arith.sitofp %69 : i32 to f32
      %71 = arith.index_cast %67 : i32 to index
      %c0_30 = arith.constant 0 : index
      %72 = vector.load %arg7[%71, %c0_30] : memref<50x32xf32, #tpu.memory_space<vmem>>, vector<1x32xf32>
      %73 = vector.broadcast %70 : f32 to vector<1x32xf32>
      %74 = arith.mulf %72, %73 : vector<1x32xf32>
      %75 = arith.addf %62, %74 : vector<1x32xf32>
      %76 = arith.addi %0, %arg10 : i32
      %c8_i32_31 = arith.constant 8 : i32
      %77 = arith.muli %76, %c8_i32_31 : i32
      %c5_i32 = arith.constant 5 : i32
      %78 = arith.addi %77, %c5_i32 : i32
      %79 = arith.index_cast %78 : i32 to index
      %80 = memref.load %arg2[%79] : memref<128xi32, #tpu.memory_space<smem>>
      %c0_i32_32 = arith.constant 0 : i32
      %81 = arith.cmpi ne, %80, %c0_i32_32 : i32
      %82 = arith.extui %81 : i1 to i32
      %83 = arith.sitofp %82 : i32 to f32
      %84 = arith.index_cast %80 : i32 to index
      %c0_33 = arith.constant 0 : index
      %85 = vector.load %arg7[%84, %c0_33] : memref<50x32xf32, #tpu.memory_space<vmem>>, vector<1x32xf32>
      %86 = vector.broadcast %83 : f32 to vector<1x32xf32>
      %87 = arith.mulf %85, %86 : vector<1x32xf32>
      %88 = arith.addf %75, %87 : vector<1x32xf32>
      %89 = arith.addi %0, %arg10 : i32
      %c8_i32_34 = arith.constant 8 : i32
      %90 = arith.muli %89, %c8_i32_34 : i32
      %c6_i32 = arith.constant 6 : i32
      %91 = arith.addi %90, %c6_i32 : i32
      %92 = arith.index_cast %91 : i32 to index
      %93 = memref.load %arg2[%92] : memref<128xi32, #tpu.memory_space<smem>>
      %c0_i32_35 = arith.constant 0 : i32
      %94 = arith.cmpi ne, %93, %c0_i32_35 : i32
      %95 = arith.extui %94 : i1 to i32
      %96 = arith.sitofp %95 : i32 to f32
      %97 = arith.index_cast %93 : i32 to index
      %c0_36 = arith.constant 0 : index
      %98 = vector.load %arg7[%97, %c0_36] : memref<50x32xf32, #tpu.memory_space<vmem>>, vector<1x32xf32>
      %99 = vector.broadcast %96 : f32 to vector<1x32xf32>
      %100 = arith.mulf %98, %99 : vector<1x32xf32>
      %101 = arith.addf %88, %100 : vector<1x32xf32>
      %102 = arith.addi %0, %arg10 : i32
      %c8_i32_37 = arith.constant 8 : i32
      %103 = arith.muli %102, %c8_i32_37 : i32
      %c7_i32 = arith.constant 7 : i32
      %104 = arith.addi %103, %c7_i32 : i32
      %105 = arith.index_cast %104 : i32 to index
      %106 = memref.load %arg2[%105] : memref<128xi32, #tpu.memory_space<smem>>
      %c0_i32_38 = arith.constant 0 : i32
      %107 = arith.cmpi ne, %106, %c0_i32_38 : i32
      %108 = arith.extui %107 : i1 to i32
      %109 = arith.sitofp %108 : i32 to f32
      %110 = arith.index_cast %106 : i32 to index
      %c0_39 = arith.constant 0 : index
      %111 = vector.load %arg7[%110, %c0_39] : memref<50x32xf32, #tpu.memory_space<vmem>>, vector<1x32xf32>
      %112 = vector.broadcast %109 : f32 to vector<1x32xf32>
      %113 = arith.mulf %111, %112 : vector<1x32xf32>
      %114 = arith.addf %101, %113 : vector<1x32xf32>
      %115 = arith.index_cast %arg10 : i32 to index
      %c64 = arith.constant 64 : index
      %116 = vector.load %arg9[%115, %c64] : memref<8x128xf32, #tpu.memory_space<vmem>>, vector<1x32xf32>
      tpu.vector_store %arg9[%115, %c64], %114 {strides = array<i32>} : memref<8x128xf32, #tpu.memory_space<vmem>>, vector<1x32xf32>,
    }
    %c8_i32_9 = arith.constant 8 : i32
    %c0_i32_10 = arith.constant 0 : i32
    %c8_i32_11 = arith.constant 8 : i32
    %9 = arith.addi %c0_i32_10, %c8_i32_11 : i32
    %c1_i32_12 = arith.constant 1 : i32
    scf.for %arg10 = %c0_i32_10 to %9 step %c1_i32_12  : i32 {
      %10 = arith.addi %0, %arg10 : i32
      %11 = arith.index_cast %10 : i32 to index
      %12 = memref.load %arg3[%11] : memref<16xi32, #tpu.memory_space<smem>>
      %13 = arith.index_cast %12 : i32 to index
      %c0_14 = arith.constant 0 : index
      %14 = vector.load %arg8[%13, %c0_14] : memref<2x32xf32, #tpu.memory_space<vmem>>, vector<1x32xf32>
      %15 = arith.index_cast %arg10 : i32 to index
      %c96 = arith.constant 96 : index
      %16 = vector.load %arg9[%15, %c96] : memref<8x128xf32, #tpu.memory_space<vmem>>, vector<1x32xf32>
      tpu.vector_store %arg9[%15, %c96], %14 {strides = array<i32>} : memref<8x128xf32, #tpu.memory_space<vmem>>, vector<1x32xf32>,
    }
    %c8_i32_13 = arith.constant 8 : i32
    return
  }
  func.func @transform_0(%arg0: i32) -> i32 {
    %c0_i32 = arith.constant 0 : i32
    %c0_i32_0 = arith.constant 0 : i32
    return %c0_i32 : i32
  }
  func.func @transform_1(%arg0: i32) -> i32 {
    %c0_i32 = arith.constant 0 : i32
    %c0_i32_0 = arith.constant 0 : i32
    return %c0_i32 : i32
  }
  func.func @transform_2(%arg0: i32) -> i32 {
    %c0_i32 = arith.constant 0 : i32
    %c0_i32_0 = arith.constant 0 : i32
    return %c0_i32 : i32
  }
  func.func @transform_3(%arg0: i32) -> (i32, i32) {
    %c0_i32 = arith.constant 0 : i32
    %c0_i32_0 = arith.constant 0 : i32
    return %arg0, %c0_i32 : i32, i32
  }
  func.func @transform_4(%arg0: i32) -> (i32, i32) {
    %c0_i32 = arith.constant 0 : i32
    %c0_i32_0 = arith.constant 0 : i32
    %c0_i32_1 = arith.constant 0 : i32
    return %c0_i32, %c0_i32_0 : i32, i32
  }
  func.func @transform_5(%arg0: i32) -> (i32, i32) {
    %c0_i32 = arith.constant 0 : i32
    %c0_i32_0 = arith.constant 0 : i32
    %c0_i32_1 = arith.constant 0 : i32
    return %c0_i32, %c0_i32_0 : i32, i32
  }
  func.func @transform_6(%arg0: i32) -> (i32, i32) {
    %c0_i32 = arith.constant 0 : i32
    %c0_i32_0 = arith.constant 0 : i32
    %c0_i32_1 = arith.constant 0 : i32
    return %c0_i32, %c0_i32_0 : i32, i32
  }
  func.func @transform_7(%arg0: i32) -> (i32, i32) {
    %c0_i32 = arith.constant 0 : i32
    %c0_i32_0 = arith.constant 0 : i32
    %c0_i32_1 = arith.constant 0 : i32
    return %c0_i32, %c0_i32_0 : i32, i32
  }
  func.func @transform_8(%arg0: i32) -> (i32, i32) {
    %c0_i32 = arith.constant 0 : i32
    %c0_i32_0 = arith.constant 0 : i32
    return %arg0, %c0_i32 : i32, i32
  }
}

</mosaic_0001>

<llo_original>
// kernel: tpu_custom_call.1
$region0: #{tpu_custom_call.1}
  #allocation0 [shape = 'u32[]', space=smem, size = 0x4, offset = 0x4, fixed_abs, tag = 'smem constant byte address 0x4 - core index']
  #allocation1 [shape = 'u32[144,128]{1,0:T(1,128)}', space=vmem, size = 0x12000, scoped, tag = 'internal scratch']
  %s0 = inlined_call_operand.vmem [shape: s32[16], index: 0, kind: input, shape index: {}]
  %s1 = inlined_call_operand.vmem [shape: s32[128], index: 1, kind: input, shape index: {}]
  %s2 = inlined_call_operand.vmem [shape: s32[16], index: 2, kind: input, shape index: {}]
  %s3 = inlined_call_operand.vmem [shape: f32[16,1], index: 3, kind: input, shape index: {}]
  %s4 = inlined_call_operand.vmem [shape: f32[1,32], index: 4, kind: input, shape index: {}]
  %s5 = inlined_call_operand.vmem [shape: f32[100,32], index: 5, kind: input, shape index: {}]
  %s6 = inlined_call_operand.vmem [shape: f32[50,32], index: 6, kind: input, shape index: {}]
  %s7 = inlined_call_operand.vmem [shape: f32[2,32], index: 7, kind: input, shape index: {}]
  %s8 = inlined_call_operand.hbm [shape: f32[16,128], index: 8, kind: output, shape index: {}]
  %s9 = sld [smem:[#allocation0]]
  $region98: #{tpu_custom_call.1} parent=0
    _
  %s11 = ssub.s32 1, %s9
  %s12 = scalar_select 0, %s11, %s9
  $region1: #{tpu_custom_call.1} parent=0
    #allocation2 [shape = 'u8[512]{0}', space=smem, size = 0x200, scoped, tag = 'input window, operand 0, single buffered']
    #allocation3 [shape = 's32[2]{0}', space=sflag, size = 0x8, scoped, tag = 'scoped memory for tpu_custom_call.1']
    #allocation4 [shape = 's32[2]{0}', space=sflag, size = 0x8, scoped, tag = 'scoped memory for tpu_custom_call.1']
    #allocation5 [shape = 'u8[512]{0}', space=smem, size = 0x200, scoped, tag = 'input window, operand 1, single buffered']
    #allocation6 [shape = 's32[1]{0}', space=sflag, size = 0x4, scoped, tag = 'scoped memory for tpu_custom_call.1']
    #allocation7 [shape = 'u8[512]{0}', space=smem, size = 0x200, scoped, tag = 'input window, operand 2, single buffered']
    #allocation8 [shape = 'u8[8192]{0}', space=vmem, size = 0x2000, scoped, tag = 'output window, operand 0']
    %13 = vsyncpa [#allocation4], 0
    %14 = vsyncpa [#allocation6], 0
    %15 = vsyncpa [#allocation3], 0
    %s16 = scalar_lea.sflag [#allocation3], 1
    %17 = vsyncpa %s16, 0
    loop: start=0, step=1, limit=4
    $region2: #{tpu_custom_call.1} parent=1 // loop_pre_header
      _
    $region3: #{tpu_custom_call.1} parent=1 // loop_header
      %s19 = sphi 0, %s23
      %p20 = scmp.ge.s32.totalorder %s19, 4
      %s27 = sphi 0, %s27
      %s29 = sphi 0, %s27
      %s30 = sphi 0, %s29
      %s44 = sphi 0, %s30
      %s48 = sphi 0, %s48
      %s50 = sphi 0, %s48
      %s51 = sphi 0, %s50
      %s65 = sphi 0, %s51
      %s69 = sphi 0, %s69
      %s71 = sphi 0, %s69
      %s72 = sphi 0, %s71
      %s86 = sphi 0, %s72
      %s92 = sphi 0, %s94
      %s95 = sphi 0, %s92
      %s96 = sphi 0, %s95
      %s112 = sphi 0, %s96
      %s116 = sphi 0, %s116
      %s118 = sphi 0, %s116
      %s119 = sphi 0, %s118
      %s133 = sphi 0, %s119
      %s137 = sphi 0, %s137
      %s139 = sphi 0, %s137
      %s140 = sphi 0, %s139
      %s154 = sphi 0, %s140
      %s158 = sphi 0, %s158
      %s160 = sphi 0, %s158
      %s161 = sphi 0, %s160
      %s175 = sphi 0, %s161
      %s179 = sphi 0, %s179
      %s181 = sphi 0, %s179
      %s182 = sphi 0, %s181
      %s196 = sphi 0, %s182
      %s202 = sphi 0, %s204
      %s205 = sphi 0, %s202
      %s206 = sphi 0, %s205
      %s222 = sphi 0, %s206
    $region4: #{tpu_custom_call.1} parent=1 // loop_header_branch
      %22 = sbr.rel (%p20) target = $region8
    $region5: #{tpu_custom_call.1} parent=1 // loop_body
      %s24 = ssub.s32 %s19, 1
      %s25 = ssub.s32 %s19, 2
      %s26 = sadd.s32 %s19, 1
      %s28 = sadd.s32 %s27, 1
      %p31 = scmp.eq.s32.totalorder %s19, 1
      %p32 = scmp.ne.s32.totalorder %s27, %s29
      %p33 = scmp.eq.s32.totalorder %s19, 0
      %p34 = por %p32, %p33
      %p35 = scmp.ne.s32.totalorder %s27, %s29
      %p36 = scmp.eq.s32.totalorder %s24, 1
      %p37 = por %p35, %p36
      %p38 = scmp.ne.s32.totalorder %s29, %s30
      %p39 = scmp.eq.s32.totalorder %s24, 0
      %p40 = por %p38, %p39
      %p41 = scmp.ne.s32.totalorder %s29, %s30
      %p42 = scmp.eq.s32.totalorder %s25, 1
      %p43 = por %p41, %p42
      %p45 = scmp.ne.s32.totalorder %s30, %s44
      %p46 = scmp.eq.s32.totalorder %s25, 0
      %p47 = por %p45, %p46
      %s49 = sadd.s32 %s48, 1
      %p52 = scmp.eq.s32.totalorder %s19, 1
      %p53 = scmp.ne.s32.totalorder %s48, %s50
      %p54 = scmp.eq.s32.totalorder %s19, 0
      %p55 = por %p53, %p54
      %p56 = scmp.ne.s32.totalorder %s48, %s50
      %p57 = scmp.eq.s32.totalorder %s24, 1
      %p58 = por %p56, %p57
      %p59 = scmp.ne.s32.totalorder %s50, %s51
      %p60 = scmp.eq.s32.totalorder %s24, 0
      %p61 = por %p59, %p60
      %p62 = scmp.ne.s32.totalorder %s50, %s51
      %p63 = scmp.eq.s32.totalorder %s25, 1
      %p64 = por %p62, %p63
      %p66 = scmp.ne.s32.totalorder %s51, %s65
      %p67 = scmp.eq.s32.totalorder %s25, 0
      %p68 = por %p66, %p67
      %s70 = sadd.s32 %s69, 1
      %p73 = scmp.eq.s32.totalorder %s19, 1
      %p74 = scmp.ne.s32.totalorder %s69, %s71
      %p75 = scmp.eq.s32.totalorder %s19, 0
      %p76 = por %p74, %p75
      %p77 = scmp.ne.s32.totalorder %s69, %s71
      %p78 = scmp.eq.s32.totalorder %s24, 1
      %p79 = por %p77, %p78
      %p80 = scmp.ne.s32.totalorder %s71, %s72
      %p81 = scmp.eq.s32.totalorder %s24, 0
      %p82 = por %p80, %p81
      %p83 = scmp.ne.s32.totalorder %s71, %s72
      %p84 = scmp.eq.s32.totalorder %s25, 1
      %p85 = por %p83, %p84
      %p87 = scmp.ne.s32.totalorder %s72, %s86
      %p88 = scmp.eq.s32.totalorder %s25, 0
      %p89 = por %p87, %p88
      %s90 = ssub.s32 %s19, %s26
      %p91 = scmp.eq.s32.totalorder %s90, 0
      %s93 = sadd.s32 %s92, 1
      %s94 = scalar_select %p91, %s92, %s93
      %p97 = pneg %p91
      %p98 = scmp.eq.s32.totalorder %s19, 1
      %p99 = por %p97, %p98
      %p100 = scmp.ne.s32.totalorder %s92, %s95
      %p101 = scmp.eq.s32.totalorder %s19, 0
      %p102 = por %p100, %p101
      %p103 = scmp.ne.s32.totalorder %s92, %s95
      %p104 = scmp.eq.s32.totalorder %s24, 1
      %p105 = por %p103, %p104
      %p106 = scmp.ne.s32.totalorder %s95, %s96
      %p107 = scmp.eq.s32.totalorder %s24, 0
      %p108 = por %p106, %p107
      %p109 = scmp.ne.s32.totalorder %s95, %s96
      %p110 = scmp.eq.s32.totalorder %s25, 1
      %p111 = por %p109, %p110
      %p113 = scmp.ne.s32.totalorder %s96, %s112
      %p114 = scmp.eq.s32.totalorder %s25, 0
      %p115 = por %p113, %p114
      %s117 = sadd.s32 %s116, 1
      %p120 = scmp.eq.s32.totalorder %s19, 1
      %p121 = scmp.ne.s32.totalorder %s116, %s118
      %p122 = scmp.eq.s32.totalorder %s19, 0
      %p123 = por %p121, %p122
      %p124 = scmp.ne.s32.totalorder %s116, %s118
      %p125 = scmp.eq.s32.totalorder %s24, 1
      %p126 = por %p124, %p125
      %p127 = scmp.ne.s32.totalorder %s118, %s119
      %p128 = scmp.eq.s32.totalorder %s24, 0
      %p129 = por %p127, %p128
      %p130 = scmp.ne.s32.totalorder %s118, %s119
      %p131 = scmp.eq.s32.totalorder %s25, 1
      %p132 = por %p130, %p131
      %p134 = scmp.ne.s32.totalorder %s119, %s133
      %p135 = scmp.eq.s32.totalorder %s25, 0
      %p136 = por %p134, %p135
      %s138 = sadd.s32 %s137, 1
      %p141 = scmp.eq.s32.totalorder %s19, 1
      %p142 = scmp.ne.s32.totalorder %s137, %s139
      %p143 = scmp.eq.s32.totalorder %s19, 0
      %p144 = por %p142, %p143
      %p145 = scmp.ne.s32.totalorder %s137, %s139
      %p146 = scmp.eq.s32.totalorder %s24, 1
      %p147 = por %p145, %p146
      %p148 = scmp.ne.s32.totalorder %s139, %s140
      %p149 = scmp.eq.s32.totalorder %s24, 0
      %p150 = por %p148, %p149
      %p151 = scmp.ne.s32.totalorder %s139, %s140
      %p152 = scmp.eq.s32.totalorder %s25, 1
      %p153 = por %p151, %p152
      %p155 = scmp.ne.s32.totalorder %s140, %s154
      %p156 = scmp.eq.s32.totalorder %s25, 0
      %p157 = por %p155, %p156
      %s159 = sadd.s32 %s158, 1
      %p162 = scmp.eq.s32.totalorder %s19, 1
      %p163 = scmp.ne.s32.totalorder %s158, %s160
      %p164 = scmp.eq.s32.totalorder %s19, 0
      %p165 = por %p163, %p164
      %p166 = scmp.ne.s32.totalorder %s158, %s160
      %p167 = scmp.eq.s32.totalorder %s24, 1
      %p168 = por %p166, %p167
      %p169 = scmp.ne.s32.totalorder %s160, %s161
      %p170 = scmp.eq.s32.totalorder %s24, 0
      %p171 = por %p169, %p170
      %p172 = scmp.ne.s32.totalorder %s160, %s161
      %p173 = scmp.eq.s32.totalorder %s25, 1
      %p174 = por %p172, %p173
      %p176 = scmp.ne.s32.totalorder %s161, %s175
      %p177 = scmp.eq.s32.totalorder %s25, 0
      %p178 = por %p176, %p177
      %s180 = sadd.s32 %s179, 1
      %p183 = scmp.eq.s32.totalorder %s19, 1
      %p184 = scmp.ne.s32.totalorder %s179, %s181
      %p185 = scmp.eq.s32.totalorder %s19, 0
      %p186 = por %p184, %p185
      %p187 = scmp.ne.s32.totalorder %s179, %s181
      %p188 = scmp.eq.s32.totalorder %s24, 1
      %p189 = por %p187, %p188
      %p190 = scmp.ne.s32.totalorder %s181, %s182
      %p191 = scmp.eq.s32.totalorder %s24, 0
      %p192 = por %p190, %p191
      %p193 = scmp.ne.s32.totalorder %s181, %s182
      %p194 = scmp.eq.s32.totalorder %s25, 1
      %p195 = por %p193, %p194
      %p197 = scmp.ne.s32.totalorder %s182, %s196
      %p198 = scmp.eq.s32.totalorder %s25, 0
      %p199 = por %p197, %p198
      %s200 = ssub.s32 %s19, %s26
      %p201 = scmp.eq.s32.totalorder %s200, 0
      %s203 = sadd.s32 %s202, 1
      %s204 = scalar_select %p201, %s202, %s203
      %p207 = pneg %p201
      %p208 = scmp.eq.s32.totalorder %s19, 1
      %p209 = por %p207, %p208
      %p210 = scmp.ne.s32.totalorder %s202, %s205
      %p211 = scmp.eq.s32.totalorder %s19, 0
      %p212 = por %p210, %p211
      %p213 = scmp.ne.s32.totalorder %s202, %s205
      %p214 = scmp.eq.s32.totalorder %s24, 1
      %p215 = por %p213, %p214
      %p216 = scmp.ne.s32.totalorder %s205, %s206
      %p217 = scmp.eq.s32.totalorder %s24, 0
      %p218 = por %p216, %p217
      %p219 = scmp.ne.s32.totalorder %s205, %s206
      %p220 = scmp.eq.s32.totalorder %s25, 1
      %p221 = por %p219, %p220
      %p223 = scmp.ne.s32.totalorder %s206, %s222
      %p224 = scmp.eq.s32.totalorder %s25, 0
      %p225 = por %p223, %p224
      %p226 = scmp.le.s32.totalorder 1, %s19
      %p227 = scmp.lt.s32.totalorder %s19, 3
      %p228 = pnand %p226, %p227
      %p229 = pneg %p228
      // Predicated region
      $region9: #{tpu_custom_call.1} parent=5 // pred_check
        _
      $region10: #{tpu_custom_call.1} parent=5 // pred_check_branch
        %231 = sbr.rel (%p228) target = $region12
      $region11: #{tpu_custom_call.1} parent=5 // pred_region
        %s232 = ssub.s32 %s19, 1
        // Predicated region
        $region13: #{tpu_custom_call.1} parent=11 // pred_check
          %p233 = pneg %p40
        $region14: #{tpu_custom_call.1} parent=11 // pred_check_branch
          %235 = sbr.rel (%p233) target = $region16
        $region15: #{tpu_custom_call.1} parent=11 // pred_region
          %s237 = ssub.s32 16, 16
          %238 = vsyncadd [#allocation4], %s237
          %s240 = sshll.u32 %s0, 4
          %s241 = int_to_ptr.vmem [resolvable:$true] %s240
          %243 = dma.vmem_to_smem %s241, 16, [#allocation2], [#allocation4]
        $region16: #{tpu_custom_call.1} parent=11 // pred_fallthru
          _
        // Predicated region
        $region17: #{tpu_custom_call.1} parent=11 // pred_check
          %p244 = pneg %p61
        $region18: #{tpu_custom_call.1} parent=11 // pred_check_branch
          %246 = sbr.rel (%p244) target = $region20
        $region19: #{tpu_custom_call.1} parent=11 // pred_region
          %s248 = ssub.s32 16, 16
          %249 = vsyncadd [#allocation6], %s248
          %s251 = sshll.u32 %s1, 4
          %s252 = int_to_ptr.vmem [resolvable:$true] %s251
          %254 = dma.vmem_to_smem %s252, 16, [#allocation5], [#allocation6]
        $region20: #{tpu_custom_call.1} parent=11 // pred_fallthru
          _
        // Predicated region
        $region21: #{tpu_custom_call.1} parent=11 // pred_check
          %p255 = pneg %p82
        $region22: #{tpu_custom_call.1} parent=11 // pred_check_branch
          %257 = sbr.rel (%p255) target = $region24
        $region23: #{tpu_custom_call.1} parent=11 // pred_region
          %s259 = ssub.s32 16, 16
          %260 = vsyncadd [#allocation6], %s259
          %s262 = sshll.u32 %s2, 4
          %s263 = int_to_ptr.vmem [resolvable:$true] %s262
          %265 = dma.vmem_to_smem %s263, 16, [#allocation7], [#allocation6]
        $region24: #{tpu_custom_call.1} parent=11 // pred_fallthru
          _
        // Predicated region
        $region25: #{tpu_custom_call.1} parent=11 // pred_check
          %p266 = pneg %p129
        $region26: #{tpu_custom_call.1} parent=11 // pred_check_branch
          %268 = sbr.rel (%p266) target = $region28
        $region27: #{tpu_custom_call.1} parent=11 // pred_region
          _
        $region28: #{tpu_custom_call.1} parent=11 // pred_fallthru
          _
        // Predicated region
        $region29: #{tpu_custom_call.1} parent=11 // pred_check
          %p269 = pneg %p150
        $region30: #{tpu_custom_call.1} parent=11 // pred_check_branch
          %271 = sbr.rel (%p269) target = $region32
        $region31: #{tpu_custom_call.1} parent=11 // pred_region
          _
        $region32: #{tpu_custom_call.1} parent=11 // pred_fallthru
          _
        // Predicated region
        $region33: #{tpu_custom_call.1} parent=11 // pred_check
          %p272 = pneg %p171
        $region34: #{tpu_custom_call.1} parent=11 // pred_check_branch
          %274 = sbr.rel (%p272) target = $region36
        $region35: #{tpu_custom_call.1} parent=11 // pred_region
          _
        $region36: #{tpu_custom_call.1} parent=11 // pred_fallthru
          _
        // Predicated region
        $region37: #{tpu_custom_call.1} parent=11 // pred_check
          %p275 = pneg %p192
        $region38: #{tpu_custom_call.1} parent=11 // pred_check_branch
          %277 = sbr.rel (%p275) target = $region40
        $region39: #{tpu_custom_call.1} parent=11 // pred_region
          _
        $region40: #{tpu_custom_call.1} parent=11 // pred_fallthru
          _
      $region12: #{tpu_custom_call.1} parent=5 // pred_fallthru
        _
      %p278 = scmp.lt.s32.totalorder %s19, 2
      // Predicated region
      $region41: #{tpu_custom_call.1} parent=5 // pred_check
        %p279 = pneg %p278
      $region42: #{tpu_custom_call.1} parent=5 // pred_check_branch
        %281 = sbr.rel (%p279) target = $region44
      $region43: #{tpu_custom_call.1} parent=5 // pred_region
        // Predicated region
        $region45: #{tpu_custom_call.1} parent=43 // pred_check
          %p282 = pneg %p102
        $region46: #{tpu_custom_call.1} parent=43 // pred_check_branch
          %284 = sbr.rel (%p282) target = $region48
        $region47: #{tpu_custom_call.1} parent=43 // pred_region
          %p285 = scmp.lt.s32.totalorder %s19, 1
          %s286 = scalar_select %p285, %s19, 1
          %s287 = smul.addr %s286, 8
          %s288 = scalar_lea.vmem %s3, %s287
        $region48: #{tpu_custom_call.1} parent=43 // pred_fallthru
          _
      $region44: #{tpu_custom_call.1} parent=5 // pred_fallthru
        _
      %p289 = scmp.le.s32.totalorder 1, %s19
      %p290 = scmp.lt.s32.totalorder %s19, 3
      %p291 = pnand %p289, %p290
      %p292 = pneg %p291
      // Predicated region
      $region49: #{tpu_custom_call.1} parent=5 // pred_check
        _
      $region50: #{tpu_custom_call.1} parent=5 // pred_check_branch
        %294 = sbr.rel (%p291) target = $region52
      $region51: #{tpu_custom_call.1} parent=5 // pred_region
        %s295 = ssub.s32 %s19, 1
        // Predicated region
        $region53: #{tpu_custom_call.1} parent=51 // pred_check
          %p296 = pneg %p40
        $region54: #{tpu_custom_call.1} parent=51 // pred_check_branch
          %298 = sbr.rel (%p296) target = $region56
        $region55: #{tpu_custom_call.1} parent=51 // pred_region
          %299 = dma.done [#allocation4], 16
        $region56: #{tpu_custom_call.1} parent=51 // pred_fallthru
          _
        // Predicated region
        $region57: #{tpu_custom_call.1} parent=51 // pred_check
          %p300 = pneg %p61
        $region58: #{tpu_custom_call.1} parent=51 // pred_check_branch
          %302 = sbr.rel (%p300) target = $region60
        $region59: #{tpu_custom_call.1} parent=51 // pred_region
          %303 = dma.done [#allocation6], 16
        $region60: #{tpu_custom_call.1} parent=51 // pred_fallthru
          _
        // Predicated region
        $region61: #{tpu_custom_call.1} parent=51 // pred_check
          %p304 = pneg %p82
        $region62: #{tpu_custom_call.1} parent=51 // pred_check_branch
          %306 = sbr.rel (%p304) target = $region64
        $region63: #{tpu_custom_call.1} parent=51 // pred_region
          %307 = dma.done [#allocation6], 16
        $region64: #{tpu_custom_call.1} parent=51 // pred_fallthru
          _
        %308 = sfence
        %p309 = pneg %p40
        %p310 = pneg %p37
        %p311 = pneg %p61
        %p312 = pneg %p58
        %p313 = pneg %p82
        %p314 = pneg %p79
        %p315 = scmp.lt.s32.totalorder %s24, 1
        %s316 = scalar_select %p315, %s24, 1
        %s317 = smul.addr %s316, 8
        %s318 = scalar_lea.vmem %s3, %s317
        %p319 = pneg %p108
        %p320 = pneg %p105
        %p321 = pneg %p129
        %p322 = pneg %p126
        %p323 = pneg %p150
        %p324 = pneg %p147
        %p325 = pneg %p171
        %p326 = pneg %p168
        %p327 = pneg %p192
        %p328 = pneg %p189
        %p329 = pneg %p218
        %p330 = pneg %p215
        %s331 = sand.u32 %s205, 1
        %s332 = scalar_lea.sflag [#allocation3], %s331
        %s333 = sand.u32 %s205, 1
        %s334 = smul.addr %s333, 8
        %s335 = scalar_lea.vmem [#allocation8], %s334
        %p336 = scmp.lt.s32.totalorder %s24, 1
        %s337 = scalar_select %p336, %s24, 1
        %s338 = smul.addr %s337, 8
        %s339 = scalar_lea.vmem %s3, %s338
        %s340 = smul.u32 %s24, 8
        loop: start=0, step=1, limit=8
        $region65: #{tpu_custom_call.1} parent=51 // loop_pre_header
          _
        $region66: #{tpu_custom_call.1} parent=51 // loop_header
          %s342 = sphi 0, %s346
          %p343 = scmp.ge.s32.totalorder %s342, 8
        $region67: #{tpu_custom_call.1} parent=51 // loop_header_branch
          %345 = sbr.rel (%p343) target = $region71
        $region68: #{tpu_custom_call.1} parent=51 // loop_body
          %s347 = sadd.s32 %s340, %s342
          %s348 = sld [smem:[#allocation2 + %s347]]
          %s349 = scalar_lea.vmem %s5, %s348
          %v350 = vld [vmem:[%s349] sm:$0x1]
          %s351 = scalar_lea.vmem %s335, %s342 [#allocation8]
          %vm352 = vcmask 253952
          %353 = vst.msk [vmem:[%s351] sm:$0x1] %vm352, %v350
        $region69: #{tpu_custom_call.1} parent=51 // loop_footer
          %s346 = sadd.s32 1, %s342
        $region70: #{tpu_custom_call.1} parent=51 // loop_footer_branch
          %341 = sbr.rel target = $region66
        $region71: #{tpu_custom_call.1} parent=51 // loop_exit
          _
        %v354 = vld [vmem:[%s339] sm:$0xff]
        %v355 = vld [vmem:[%s4] sm:$0x1]
        %357 = vset.pattern.permute.xlu0 0
        %358 = vperm.xlu0 %357, %v354
        %v359 = vpop.permute.xlu0 %358
        %v362 = vlaneseq
        %v363 = vshrl.u32 %v362, 7
        %v364 = vsub.s32 0, %v363
        %v365 = vrot.slane %v355, %v364
        %v367 = vmul.f32 %v359, %v365
        %369 = vrot.lane.b32.xlu0 %v367, 32
        %v370 = vpop.permute.xlu0 %369
        %vm372 = vcmask 523520
        %373 = vst.msk [vmem:[%s335] sm:$0xff] %vm372, %v370
        loop: start=0, step=1, limit=8
        $region72: #{tpu_custom_call.1} parent=51 // loop_pre_header
          _
        $region73: #{tpu_custom_call.1} parent=51 // loop_header
          %s375 = sphi 0, %s379
          %p376 = scmp.ge.s32.totalorder %s375, 8
        $region74: #{tpu_custom_call.1} parent=51 // loop_header_branch
          %378 = sbr.rel (%p376) target = $region78
        $region75: #{tpu_custom_call.1} parent=51 // loop_body
          %s380 = sadd.s32 %s340, %s375
          %s381 = smul.u32 %s380, 8
          %s382 = sld [smem:[#allocation5 + %s381]]
          %p383 = scmp.ne.s32.totalorder %s382, 0
          %s384 = scalar_select %p383, 1, 0
          %s385 = scvt.s32.f32 %s384
          %s386 = scalar_lea.vmem %s6, %s382
          %v387 = vld [vmem:[%s386] sm:$0x1]
          %v388 = vstv %s385
          %v389 = vmul.f32 %v387, %v388
          %v390 = vadd.f32 %v389, 0.0
          %s391 = sadd.s32 %s381, 1
          %s392 = sld [smem:[#allocation5 + %s391]]
          %p393 = scmp.ne.s32.totalorder %s392, 0
          %s394 = scalar_select %p393, 1, 0
          %s395 = scvt.s32.f32 %s394
          %s396 = scalar_lea.vmem %s6, %s392
          %v397 = vld [vmem:[%s396] sm:$0x1]
          %v398 = vstv %s395
          %v399 = vmul.f32 %v397, %v398
          %v400 = vadd.f32 %v390, %v399
          %s401 = sadd.s32 %s381, 2
          %s402 = sld [smem:[#allocation5 + %s401]]
          %p403 = scmp.ne.s32.totalorder %s402, 0
          %s404 = scalar_select %p403, 1, 0
          %s405 = scvt.s32.f32 %s404
          %s406 = scalar_lea.vmem %s6, %s402
          %v407 = vld [vmem:[%s406] sm:$0x1]
          %v408 = vstv %s405
          %v409 = vmul.f32 %v407, %v408
          %v410 = vadd.f32 %v400, %v409
          %s411 = sadd.s32 %s381, 3
          %s412 = sld [smem:[#allocation5 + %s411]]
          %p413 = scmp.ne.s32.totalorder %s412, 0
          %s414 = scalar_select %p413, 1, 0
          %s415 = scvt.s32.f32 %s414
          %s416 = scalar_lea.vmem %s6, %s412
          %v417 = vld [vmem:[%s416] sm:$0x1]
          %v418 = vstv %s415
          %v419 = vmul.f32 %v417, %v418
          %v420 = vadd.f32 %v410, %v419
          %s421 = sadd.s32 %s381, 4
          %s422 = sld [smem:[#allocation5 + %s421]]
          %p423 = scmp.ne.s32.totalorder %s422, 0
          %s424 = scalar_select %p423, 1, 0
          %s425 = scvt.s32.f32 %s424
          %s426 = scalar_lea.vmem %s6, %s422
          %v427 = vld [vmem:[%s426] sm:$0x1]
          %v428 = vstv %s425
          %v429 = vmul.f32 %v427, %v428
          %v430 = vadd.f32 %v420, %v429
          %s431 = sadd.s32 %s381, 5
          %s432 = sld [smem:[#allocation5 + %s431]]
          %p433 = scmp.ne.s32.totalorder %s432, 0
          %s434 = scalar_select %p433, 1, 0
          %s435 = scvt.s32.f32 %s434
          %s436 = scalar_lea.vmem %s6, %s432
          %v437 = vld [vmem:[%s436] sm:$0x1]
          %v438 = vstv %s435
          %v439 = vmul.f32 %v437, %v438
          %v440 = vadd.f32 %v430, %v439
          %s441 = sadd.s32 %s381, 6
          %s442 = sld [smem:[#allocation5 + %s441]]
          %p443 = scmp.ne.s32.totalorder %s442, 0
          %s444 = scalar_select %p443, 1, 0
          %s445 = scvt.s32.f32 %s444
          %s446 = scalar_lea.vmem %s6, %s442
          %v447 = vld [vmem:[%s446] sm:$0x1]
          %v448 = vstv %s445
          %v449 = vmul.f32 %v447, %v448
          %v450 = vadd.f32 %v440, %v449
          %s451 = sadd.s32 %s381, 7
          %s452 = sld [smem:[#allocation5 + %s451]]
          %p453 = scmp.ne.s32.totalorder %s452, 0
          %s454 = scalar_select %p453, 1, 0
          %s455 = scvt.s32.f32 %s454
          %s456 = scalar_lea.vmem %s6, %s452
          %v457 = vld [vmem:[%s456] sm:$0x1]
          %v458 = vstv %s455
          %v459 = vmul.f32 %v457, %v458
          %v460 = vadd.f32 %v450, %v459
          %462 = vrot.lane.b32.xlu0 %v460, 64
          %v463 = vpop.permute.xlu0 %462
          %s465 = scalar_lea.vmem %s335, %s375 [#allocation8]
          %vm466 = vcmask 778752
          %467 = vst.msk [vmem:[%s465] sm:$0x1] %vm466, %v463
        $region76: #{tpu_custom_call.1} parent=51 // loop_footer
          %s379 = sadd.s32 1, %s375
        $region77: #{tpu_custom_call.1} parent=51 // loop_footer_branch
          %374 = sbr.rel target = $region73
        $region78: #{tpu_custom_call.1} parent=51 // loop_exit
          _
        loop: start=0, step=1, limit=8
        $region79: #{tpu_custom_call.1} parent=51 // loop_pre_header
          _
        $region80: #{tpu_custom_call.1} parent=51 // loop_header
          %s469 = sphi 0, %s473
          %p470 = scmp.ge.s32.totalorder %s469, 8
        $region81: #{tpu_custom_call.1} parent=51 // loop_header_branch
          %472 = sbr.rel (%p470) target = $region85
        $region82: #{tpu_custom_call.1} parent=51 // loop_body
          %s474 = sadd.s32 %s340, %s469
          %s475 = sld [smem:[#allocation7 + %s474]]
          %s476 = scalar_lea.vmem %s7, %s475
          %v477 = vld [vmem:[%s476] sm:$0x1]
          %479 = vrot.lane.b32.xlu0 %v477, 96
          %v480 = vpop.permute.xlu0 %479
          %s482 = scalar_lea.vmem %s335, %s469 [#allocation8]
          %vm483 = vcmask 1041152
          %484 = vst.msk [vmem:[%s482] sm:$0x1] %vm483, %v480
        $region83: #{tpu_custom_call.1} parent=51 // loop_footer
          %s473 = sadd.s32 1, %s469
        $region84: #{tpu_custom_call.1} parent=51 // loop_footer_branch
          %468 = sbr.rel target = $region80
        $region85: #{tpu_custom_call.1} parent=51 // loop_exit
          _
        %s485 = sand.u32 %s205, 1
        %s486 = scalar_lea.sflag [#allocation3], %s485
        %s487 = sand.u32 %s205, 1
        %s488 = smul.addr %s487, 8
        %s489 = scalar_lea.vmem [#allocation8], %s488
        // Predicated region
        $region86: #{tpu_custom_call.1} parent=51 // pred_check
          %p490 = pneg %p215
        $region87: #{tpu_custom_call.1} parent=51 // pred_check_branch
          %492 = sbr.rel (%p490) target = $region89
        $region88: #{tpu_custom_call.1} parent=51 // pred_region
          %s494 = ssub.s32 128, 128
          %495 = vsyncadd %s486, %s494
          %s496 = smul.addr %s24, 128
          %s497 = scalar_lea.hbm %s8, %s496
          %s499 = sshll.u32 %s489, 4
          %s500 = int_to_ptr.vmem [resolvable:$true] %s499
          %502 = dma.vmem_to_hbm [thread:$0]  %s500, 128, %s497, %s486
        $region89: #{tpu_custom_call.1} parent=51 // pred_fallthru
          _
      $region52: #{tpu_custom_call.1} parent=5 // pred_fallthru
        _
      %p503 = scmp.le.s32.totalorder 2, %s19
      // Predicated region
      $region90: #{tpu_custom_call.1} parent=5 // pred_check
        %p504 = pneg %p503
      $region91: #{tpu_custom_call.1} parent=5 // pred_check_branch
        %506 = sbr.rel (%p504) target = $region93
      $region92: #{tpu_custom_call.1} parent=5 // pred_region
        %s507 = ssub.s32 %s19, 2
        // Predicated region
        $region94: #{tpu_custom_call.1} parent=92 // pred_check
          %p508 = pneg %p221
        $region95: #{tpu_custom_call.1} parent=92 // pred_check_branch
          %510 = sbr.rel (%p508) target = $region97
        $region96: #{tpu_custom_call.1} parent=92 // pred_region
          %s511 = sand.u32 %s206, 1
          %s512 = scalar_lea.sflag [#allocation3], %s511
          %s513 = sand.u32 %s206, 1
          %s514 = smul.addr %s513, 8
          %s515 = scalar_lea.vmem [#allocation8], %s514
          %516 = dma.done %s512, 128
        $region97: #{tpu_custom_call.1} parent=92 // pred_fallthru
          _
      $region93: #{tpu_custom_call.1} parent=5 // pred_fallthru
        _
    $region6: #{tpu_custom_call.1} parent=1 // loop_footer
      %s23 = sadd.s32 1, %s19
    $region7: #{tpu_custom_call.1} parent=1 // loop_footer_branch
      %18 = sbr.rel target = $region3
    $region8: #{tpu_custom_call.1} parent=1 // loop_exit
      _
    %517 = vsyncpa [#allocation3], 1
    %s518 = scalar_lea.sflag [#allocation3], 1
    %519 = vsyncpa %s518, 1
    %520 = vsyncpa [#allocation4], 1
    %s521 = scalar_lea.sflag [#allocation4], 1
    %522 = vsyncpa %s521, 1
    %523 = vsyncpa [#allocation6], 1

</llo_original>
